<compile_context>
chip_gen: v7x
topology: tpu7x:2x2x1
jax: 0.10.0
libtpu: 0.0.40
codegen_flags: <defaults>
</compile_context>

<pallas_src>
import functools

import jax
import jax.numpy as jnp
from jax.experimental import pallas as pl
from jax.experimental.pallas import tpu as pltpu

IN_FEATURES = 31
HIDDEN = 128
GATES = 3 * HIDDEN      # i, g, o  (f-gate pruned)
NUM_CLASSES = 2
OUT_PAD = 128           # lane-dense output slab; real logits live in [:, :2]
TILE_N_MAX = 2048       # large tile to amortize per-grid-step overhead


def _round_up(x, m):
    return ((x + m - 1) // m) * m


def _sigmoid(x):
    # sigmoid(x) == 0.5 * tanh(0.5 * x) + 0.5  -> single EUP transcendental
    return 0.5 * jnp.tanh(0.5 * x) + 0.5


def _gates_to_h(gates_f32, act_dtype):
    """gates: (N, 3H) f32 laid out as [i | g | o]. Zero initial cell state.

    The tanh/sigmoid chain runs in `act_dtype` (bf16 on v6e/v7x where the EUP has a
    bf16 path ~2x f32 throughput; f32 on v5e/older).
    """
    g = gates_f32.astype(act_dtype)
    i = _sigmoid(g[:, 0 * HIDDEN:1 * HIDDEN])
    gg = jnp.tanh(g[:, 1 * HIDDEN:2 * HIDDEN])
    o = _sigmoid(g[:, 2 * HIDDEN:3 * HIDDEN])
    return o * jnp.tanh(i * gg)


def rnn_kernel(x_ref, wih1_ref, b1_ref, wih2_ref, b2_ref, wout_ref, bout_ref,
               o_ref, *, act_dtype):
    # Layer 0: in-kernel bf16 cast of x, f32 bias add (VPU add is free under EUP bound).
    x = x_ref[...].astype(jnp.bfloat16)                              # (TN, 31)
    g1 = jnp.dot(x, wih1_ref[...],
                 preferred_element_type=jnp.float32) + b1_ref[...]   # (TN, 384) f32
    h1 = _gates_to_h(g1, act_dtype)                                  # (TN, 128)
    # Layer 1.
    g2 = jnp.dot(h1.astype(jnp.bfloat16), wih2_ref[...],
                 preferred_element_type=jnp.float32) + b2_ref[...]   # (TN, 384) f32
    h2 = _gates_to_h(g2, act_dtype)                                  # (TN, 128)
    # Linear head (zero-padded to 128 output lanes -> unmasked lane-dense stores).
    out = jnp.dot(h2.astype(jnp.bfloat16), wout_ref[...],
                  preferred_element_type=jnp.float32) + bout_ref[...]
    o_ref[...] = out.astype(o_ref.dtype)                             # (TN, 128) bf16


def _activation_dtype():
    """bf16 transcendentals only where the EUP/VPU have a bf16 path (v6e / v7x)."""
    try:
        kind = jax.devices()[0].device_kind.lower()
    except Exception:
        return jnp.float32
    if ("v6" in kind) or ("v7" in kind):
        return jnp.bfloat16
    return jnp.float32


def rnn_forward(x, params):
    """x: any float array whose size is divisible by 31 (mirrors x.reshape(-1, 1, 31))."""
    wih1, b1, wih2, b2, wout, bout = params

    x2d = x.reshape(-1, IN_FEATURES).astype(jnp.float32)             # (N, 31)
    n = x2d.shape[0]

    # Row padding: bf16 sublane pack = 16.  Balance the tile across the grid so
    # padding waste is at most one sublane group, and force >=2 grid steps when
    # possible so both v7x TensorCores get work under ("parallel",).
    n_sub = _round_up(n, 16)
    num_tiles = pl.cdiv(n_sub, TILE_N_MAX)
    if n_sub >= 32:
        num_tiles = max(num_tiles, 2)
    tile_n = _round_up(pl.cdiv(n_sub, num_tiles), 16)
    n_pad = tile_n * pl.cdiv(n_sub, tile_n)

    x_pad = jnp.pad(x2d, ((0, n_pad - n), (0, 0)))                   # (n_pad, 31) f32
    grid = (n_pad // tile_n,)

    kernel = functools.partial(rnn_kernel, act_dtype=_activation_dtype())

    out_pad = pl.pallas_call(
        kernel,
        out_shape=jax.ShapeDtypeStruct((n_pad, OUT_PAD), jnp.bfloat16),
        grid=grid,
        in_specs=[
            pl.BlockSpec((tile_n, IN_FEATURES), lambda i: (i, 0)),    # x tile (pipelined)
            pl.BlockSpec((IN_FEATURES, GATES), lambda i: (0, 0)),     # resident weights
            pl.BlockSpec((1, GATES), lambda i: (0, 0)),
            pl.BlockSpec((HIDDEN, GATES), lambda i: (0, 0)),
            pl.BlockSpec((1, GATES), lambda i: (0, 0)),
            pl.BlockSpec((HIDDEN, OUT_PAD), lambda i: (0, 0)),
            pl.BlockSpec((1, OUT_PAD), lambda i: (0, 0)),
        ],
        out_specs=pl.BlockSpec((tile_n, OUT_PAD), lambda i: (i, 0)),
        compiler_params=pltpu.CompilerParams(
            dimension_semantics=("parallel",),                        # megacore / v7x 2-TC
            vmem_limit_bytes=32 << 20,                                # ~12 MiB actually used
        ),
    )(x_pad, wih1, b1, wih2, b2, wout, bout)

    return out_pad[:n, :NUM_CLASSES].astype(jnp.float32)


# ----------------------------- parameter handling -----------------------------

def init_raw_params(key):
    """PyTorch-shaped raw parameters (uniform(-1/sqrt(H), 1/sqrt(H)))."""
    k = 1.0 / jnp.sqrt(jnp.float32(HIDDEN))
    keys = jax.random.split(key, 8)

    def u(kk, shape):
        return jax.random.uniform(kk, shape, jnp.float32, minval=-k, maxval=k)

    return dict(
        w_ih_l0=u(keys[0], (4 * HIDDEN, IN_FEATURES)),   # gate order: i, f, g, o
        b_ih_l0=u(keys[1], (4 * HIDDEN,)),
        b_hh_l0=u(keys[2], (4 * HIDDEN,)),
        w_ih_l1=u(keys[3], (4 * HIDDEN, HIDDEN)),
        b_ih_l1=u(keys[4], (4 * HIDDEN,)),
        b_hh_l1=u(keys[5], (4 * HIDDEN,)),
        w_out=u(keys[6], (NUM_CLASSES, HIDDEN)),
        b_out=u(keys[7], (NUM_CLASSES,)),
    )


def _keep_igo(rows_4h):
    """Drop the f-gate block from a (4H, ...) or (4H,) PyTorch gate-stacked tensor."""
    return jnp.concatenate(
        [rows_4h[0 * HIDDEN:1 * HIDDEN],    # i
         rows_4h[2 * HIDDEN:3 * HIDDEN],    # g
         rows_4h[3 * HIDDEN:4 * HIDDEN]],   # o
        axis=0)


def pack_params(raw):
    """Prune f-gate, transpose, pad head to 128 lanes; weights bf16, biases f32."""
    wih1 = _keep_igo(raw["w_ih_l0"]).T.astype(jnp.bfloat16)                  # (31, 384)
    b1 = _keep_igo(raw["b_ih_l0"] + raw["b_hh_l0"]).reshape(1, GATES)        # (1, 384) f32

    wih2 = _keep_igo(raw["w_ih_l1"]).T.astype(jnp.bfloat16)                  # (128, 384)
    b2 = _keep_igo(raw["b_ih_l1"] + raw["b_hh_l1"]).reshape(1, GATES)        # (1, 384) f32

    wout = jnp.zeros((HIDDEN, OUT_PAD), jnp.float32)
    wout = wout.at[:, :NUM_CLASSES].set(raw["w_out"].T).astype(jnp.bfloat16)  # (128, 128)
    bout = jnp.zeros((1, OUT_PAD), jnp.float32).at[0, :NUM_CLASSES].set(raw["b_out"])
    return wih1, b1, wih2, b2, wout, bout


def reference_forward(x, raw):
    """Pure-JAX f32 reference of the full PyTorch module (no pruning, full LSTM cell)."""
    x2d = x.reshape(-1, IN_FEATURES).astype(jnp.float32)
    n = x2d.shape[0]
    h = jnp.zeros((n, HIDDEN), jnp.float32)
    c = jnp.zeros((n, HIDDEN), jnp.float32)

    def cell(inp, w_ih, b_ih, b_hh, h0, c0):
        gates = inp @ w_ih.T + b_ih + b_hh          # + h0 @ W_hh.T, which is 0
        i = jax.nn.sigmoid(gates[:, 0 * HIDDEN:1 * HIDDEN])
        f = jax.nn.sigmoid(gates[:, 1 * HIDDEN:2 * HIDDEN])
        g = jnp.tanh(gates[:, 2 * HIDDEN:3 * HIDDEN])
        o = jax.nn.sigmoid(gates[:, 3 * HIDDEN:4 * HIDDEN])
        c1 = f * c0 + i * g
        return o * jnp.tanh(c1)

    h1 = cell(x2d, raw["w_ih_l0"], raw["b_ih_l0"], raw["b_hh_l0"], h, c)
    h2 = cell(h1, raw["w_ih_l1"], raw["b_ih_l1"], raw["b_hh_l1"], h, c)
    return h2 @ raw["w_out"].T + raw["b_out"]


if __name__ == "__main__":
    key = jax.random.PRNGKey(0)
    pkey, xkey = jax.random.split(key)

    raw = init_raw_params(pkey)
    params = pack_params(raw)

    # Small input consistent with the module: reshape(-1, 1, 31) -> N=8 sequences of length 1.
    x = jax.random.normal(xkey, (8, IN_FEATURES), dtype=jnp.float32)

    out = rnn_forward(x, params)
    jax.block_until_ready(out)
    assert out.shape == (8, NUM_CLASSES)

    ref = reference_forward(x, raw)
    assert jnp.allclose(out, ref, atol=5e-2, rtol=5e-2), (out, ref)

    print("KERNEL_OK")
</pallas_src>

<mosaic_0001>
module attributes {stable_mosaic.version = 11 : i64} {
  func.func @rnn_kernel(%arg0: i32, %arg1: memref<16x31xf32, #tpu.memory_space<vmem>>, %arg2: memref<31x384xbf16, #tpu.memory_space<vmem>>, %arg3: memref<1x384xf32, #tpu.memory_space<vmem>>, %arg4: memref<128x384xbf16, #tpu.memory_space<vmem>>, %arg5: memref<1x384xf32, #tpu.memory_space<vmem>>, %arg6: memref<128x128xbf16, #tpu.memory_space<vmem>>, %arg7: memref<1x128xf32, #tpu.memory_space<vmem>>, %arg8: memref<16x128xbf16, #tpu.memory_space<vmem>>) attributes {dimension_semantics = [#tpu.dimension_semantics<parallel>], iteration_bounds = array<i64: 1>, scalar_prefetch = 0 : i64, scratch_operands = 0 : i64, tpu.core_type = #tpu.core_type<tc>, window_params = [{transform_indices = @transform_0, window_bounds = array<i64: 16, 31>}, {pipeline_mode = #tpu.pipeline_mode<synchronous>, transform_indices = @transform_1, window_bounds = array<i64: 31, 384>}, {pipeline_mode = #tpu.pipeline_mode<synchronous>, transform_indices = @transform_2, window_bounds = array<i64: 1, 384>}, {pipeline_mode = #tpu.pipeline_mode<synchronous>, transform_indices = @transform_3, window_bounds = array<i64: 128, 384>}, {pipeline_mode = #tpu.pipeline_mode<synchronous>, transform_indices = @transform_4, window_bounds = array<i64: 1, 384>}, {pipeline_mode = #tpu.pipeline_mode<synchronous>, transform_indices = @transform_5, window_bounds = array<i64: 128, 128>}, {pipeline_mode = #tpu.pipeline_mode<synchronous>, transform_indices = @transform_6, window_bounds = array<i64: 1, 128>}, {transform_indices = @transform_7, window_bounds = array<i64: 16, 128>}]} {
    %c0 = arith.constant 0 : index
    %c0_0 = arith.constant 0 : index
    %0 = vector.load %arg1[%c0, %c0_0] : memref<16x31xf32, #tpu.memory_space<vmem>>, vector<16x31xf32>
    %1 = arith.truncf %0 : vector<16x31xf32> to vector<16x31xbf16>
    %c0_1 = arith.constant 0 : index
    %c0_2 = arith.constant 0 : index
    %2 = vector.load %arg2[%c0_1, %c0_2] : memref<31x384xbf16, #tpu.memory_space<vmem>>, vector<31x384xbf16>
    %cst = arith.constant dense<0.000000e+00> : vector<16x384xf32>
    %3 = tpu.matmul %1, %2, %cst {dimension_numbers = #tpu.dot_dimension_numbers<[1], [0], [0], [1], [0, 0, 1, 1], [], []>} : vector<16x31xbf16>, vector<31x384xbf16>, vector<16x384xf32> -> vector<16x384xf32>
    %c0_3 = arith.constant 0 : index
    %c0_4 = arith.constant 0 : index
    %4 = vector.load %arg3[%c0_3, %c0_4] : memref<1x384xf32, #tpu.memory_space<vmem>>, vector<1x384xf32>
    %5 = vector.broadcast %4 : vector<1x384xf32> to vector<16x384xf32>
    %6 = arith.addf %3, %5 : vector<16x384xf32>
    %7 = vector.extract_strided_slice %6 {offsets = [0, 0], sizes = [16, 128], strides = [1, 1]} : vector<16x384xf32> to vector<16x128xf32>
    %cst_5 = arith.constant 5.000000e-01 : f32
    %8 = vector.broadcast %cst_5 : f32 to vector<16x128xf32>
    %9 = arith.mulf %8, %7 : vector<16x128xf32>
    %10 = math.tanh %9 : vector<16x128xf32>
    %cst_6 = arith.constant 5.000000e-01 : f32
    %11 = vector.broadcast %cst_6 : f32 to vector<16x128xf32>
    %12 = arith.mulf %11, %10 : vector<16x128xf32>
    %cst_7 = arith.constant 5.000000e-01 : f32
    %13 = vector.broadcast %cst_7 : f32 to vector<16x128xf32>
    %14 = arith.addf %12, %13 : vector<16x128xf32>
    %15 = vector.extract_strided_slice %6 {offsets = [0, 128], sizes = [16, 128], strides = [1, 1]} : vector<16x384xf32> to vector<16x128xf32>
    %16 = math.tanh %15 : vector<16x128xf32>
    %17 = vector.extract_strided_slice %6 {offsets = [0, 256], sizes = [16, 128], strides = [1, 1]} : vector<16x384xf32> to vector<16x128xf32>
    %cst_8 = arith.constant 5.000000e-01 : f32
    %18 = vector.broadcast %cst_8 : f32 to vector<16x128xf32>
    %19 = arith.mulf %18, %17 : vector<16x128xf32>
    %20 = math.tanh %19 : vector<16x128xf32>
    %cst_9 = arith.constant 5.000000e-01 : f32
    %21 = vector.broadcast %cst_9 : f32 to vector<16x128xf32>
    %22 = arith.mulf %21, %20 : vector<16x128xf32>
    %cst_10 = arith.constant 5.000000e-01 : f32
    %23 = vector.broadcast %cst_10 : f32 to vector<16x128xf32>
    %24 = arith.addf %22, %23 : vector<16x128xf32>
    %25 = arith.mulf %14, %16 : vector<16x128xf32>
    %26 = math.tanh %25 : vector<16x128xf32>
    %27 = arith.mulf %24, %26 : vector<16x128xf32>
    %28 = arith.truncf %27 : vector<16x128xf32> to vector<16x128xbf16>
    %c0_11 = arith.constant 0 : index
    %c0_12 = arith.constant 0 : index
    %29 = vector.load %arg4[%c0_11, %c0_12] : memref<128x384xbf16, #tpu.memory_space<vmem>>, vector<128x384xbf16>
    %cst_13 = arith.constant dense<0.000000e+00> : vector<16x384xf32>
    %30 = tpu.matmul %28, %29, %cst_13 {dimension_numbers = #tpu.dot_dimension_numbers<[1], [0], [0], [1], [0, 0, 1, 1], [], []>} : vector<16x128xbf16>, vector<128x384xbf16>, vector<16x384xf32> -> vector<16x384xf32>
    %c0_14 = arith.constant 0 : index
    %c0_15 = arith.constant 0 : index
    %31 = vector.load %arg5[%c0_14, %c0_15] : memref<1x384xf32, #tpu.memory_space<vmem>>, vector<1x384xf32>
    %32 = vector.broadcast %31 : vector<1x384xf32> to vector<16x384xf32>
    %33 = arith.addf %30, %32 : vector<16x384xf32>
    %34 = vector.extract_strided_slice %33 {offsets = [0, 0], sizes = [16, 128], strides = [1, 1]} : vector<16x384xf32> to vector<16x128xf32>
    %cst_16 = arith.constant 5.000000e-01 : f32
    %35 = vector.broadcast %cst_16 : f32 to vector<16x128xf32>
    %36 = arith.mulf %35, %34 : vector<16x128xf32>
    %37 = math.tanh %36 : vector<16x128xf32>
    %cst_17 = arith.constant 5.000000e-01 : f32
    %38 = vector.broadcast %cst_17 : f32 to vector<16x128xf32>
    %39 = arith.mulf %38, %37 : vector<16x128xf32>
    %cst_18 = arith.constant 5.000000e-01 : f32
    %40 = vector.broadcast %cst_18 : f32 to vector<16x128xf32>
    %41 = arith.addf %39, %40 : vector<16x128xf32>
    %42 = vector.extract_strided_slice %33 {offsets = [0, 128], sizes = [16, 128], strides = [1, 1]} : vector<16x384xf32> to vector<16x128xf32>
    %43 = math.tanh %42 : vector<16x128xf32>
    %44 = vector.extract_strided_slice %33 {offsets = [0, 256], sizes = [16, 128], strides = [1, 1]} : vector<16x384xf32> to vector<16x128xf32>
    %cst_19 = arith.constant 5.000000e-01 : f32
    %45 = vector.broadcast %cst_19 : f32 to vector<16x128xf32>
    %46 = arith.mulf %45, %44 : vector<16x128xf32>
    %47 = math.tanh %46 : vector<16x128xf32>
    %cst_20 = arith.constant 5.000000e-01 : f32
    %48 = vector.broadcast %cst_20 : f32 to vector<16x128xf32>
    %49 = arith.mulf %48, %47 : vector<16x128xf32>
    %cst_21 = arith.constant 5.000000e-01 : f32
    %50 = vector.broadcast %cst_21 : f32 to vector<16x128xf32>
    %51 = arith.addf %49, %50 : vector<16x128xf32>
    %52 = arith.mulf %41, %43 : vector<16x128xf32>
    %53 = math.tanh %52 : vector<16x128xf32>
    %54 = arith.mulf %51, %53 : vector<16x128xf32>
    %55 = arith.truncf %54 : vector<16x128xf32> to vector<16x128xbf16>
    %c0_22 = arith.constant 0 : index
    %c0_23 = arith.constant 0 : index
    %56 = vector.load %arg6[%c0_22, %c0_23] : memref<128x128xbf16, #tpu.memory_space<vmem>>, vector<128x128xbf16>
    %cst_24 = arith.constant dense<0.000000e+00> : vector<16x128xf32>
    %57 = tpu.matmul %55, %56, %cst_24 {dimension_numbers = #tpu.dot_dimension_numbers<[1], [0], [0], [1], [0, 0, 1, 1], [], []>} : vector<16x128xbf16>, vector<128x128xbf16>, vector<16x128xf32> -> vector<16x128xf32>
    %c0_25 = arith.constant 0 : index
    %c0_26 = arith.constant 0 : index
    %58 = vector.load %arg7[%c0_25, %c0_26] : memref<1x128xf32, #tpu.memory_space<vmem>>, vector<1x128xf32>
    %59 = vector.broadcast %58 : vector<1x128xf32> to vector<16x128xf32>
    %60 = arith.addf %57, %59 : vector<16x128xf32>
    %61 = arith.truncf %60 : vector<16x128xf32> to vector<16x128xbf16>
    %c0_27 = arith.constant 0 : index
    %c0_28 = arith.constant 0 : index
    %62 = vector.load %arg8[%c0_27, %c0_28] : memref<16x128xbf16, #tpu.memory_space<vmem>>, vector<16x128xbf16>
    tpu.vector_store %arg8[%c0_27, %c0_28], %61 {strides = array<i32>} : memref<16x128xbf16, #tpu.memory_space<vmem>>, vector<16x128xbf16>,
    return
  }
  func.func @transform_0(%arg0: i32) -> (i32, i32) {
    %c0_i32 = arith.constant 0 : i32
    %c0_i32_0 = arith.constant 0 : i32
    return %arg0, %c0_i32 : i32, i32
  }
  func.func @transform_1(%arg0: i32) -> (i32, i32) {
    %c0_i32 = arith.constant 0 : i32
    %c0_i32_0 = arith.constant 0 : i32
    %c0_i32_1 = arith.constant 0 : i32
    return %c0_i32, %c0_i32_0 : i32, i32
  }
  func.func @transform_2(%arg0: i32) -> (i32, i32) {
    %c0_i32 = arith.constant 0 : i32
    %c0_i32_0 = arith.constant 0 : i32
    %c0_i32_1 = arith.constant 0 : i32
    return %c0_i32, %c0_i32_0 : i32, i32
  }
  func.func @transform_3(%arg0: i32) -> (i32, i32) {
    %c0_i32 = arith.constant 0 : i32
    %c0_i32_0 = arith.constant 0 : i32
    %c0_i32_1 = arith.constant 0 : i32
    return %c0_i32, %c0_i32_0 : i32, i32
  }
  func.func @transform_4(%arg0: i32) -> (i32, i32) {
    %c0_i32 = arith.constant 0 : i32
    %c0_i32_0 = arith.constant 0 : i32
    %c0_i32_1 = arith.constant 0 : i32
    return %c0_i32, %c0_i32_0 : i32, i32
  }
  func.func @transform_5(%arg0: i32) -> (i32, i32) {
    %c0_i32 = arith.constant 0 : i32
    %c0_i32_0 = arith.constant 0 : i32
    %c0_i32_1 = arith.constant 0 : i32
    return %c0_i32, %c0_i32_0 : i32, i32
  }
  func.func @transform_6(%arg0: i32) -> (i32, i32) {
    %c0_i32 = arith.constant 0 : i32
    %c0_i32_0 = arith.constant 0 : i32
    %c0_i32_1 = arith.constant 0 : i32
    return %c0_i32, %c0_i32_0 : i32, i32
  }
  func.func @transform_7(%arg0: i32) -> (i32, i32) {
    %c0_i32 = arith.constant 0 : i32
    %c0_i32_0 = arith.constant 0 : i32
    return %arg0, %c0_i32 : i32, i32
  }
}

</mosaic_0001>

<llo_original>
// kernel: tpu_custom_call.1
$region0: #{tpu_custom_call.1}
  #allocation0 [shape = 'u32[]', space=smem, size = 0x4, offset = 0x4, fixed_abs, tag = 'smem constant byte address 0x4 - core index']
  #allocation1 [shape = 'u32[144,128]{1,0:T(1,128)}', space=vmem, size = 0x12000, scoped, tag = 'internal scratch']
  %s0 = inlined_call_operand.hbm [shape: f32[16,31], index: 0, kind: input, shape index: {}]
  %s1 = inlined_call_operand.hbm [shape: bf16[31,384], index: 1, kind: input, shape index: {}]
  %s2 = inlined_call_operand.vmem [shape: f32[1,384], index: 2, kind: input, shape index: {}]
  %s3 = inlined_call_operand.hbm [shape: bf16[128,384], index: 3, kind: input, shape index: {}]
  %s4 = inlined_call_operand.vmem [shape: f32[1,384], index: 4, kind: input, shape index: {}]
  %s5 = inlined_call_operand.hbm [shape: bf16[128,128], index: 5, kind: input, shape index: {}]
  %s6 = inlined_call_operand.vmem [shape: f32[1,128], index: 6, kind: input, shape index: {}]
  %s7 = inlined_call_operand.hbm [shape: bf16[16,128], index: 7, kind: output, shape index: {}]
  %s8 = sld [smem:[#allocation0]]
  $region54: #{tpu_custom_call.1} parent=0
    _
  %s10 = ssub.s32 1, %s8
  %s11 = scalar_select 0, %s10, %s8
  $region1: #{tpu_custom_call.1} parent=0
    #allocation2 [shape = 'u8[8192]{0}', space=vmem, size = 0x2000, scoped, tag = 'input window, operand 0, single buffered']
    #allocation3 [shape = 's32[1]{0}', space=sflag, size = 0x4, scoped, tag = 'scoped memory for tpu_custom_call.1']
    #allocation4 [shape = 's32[1]{0}', space=sflag, size = 0x4, scoped, tag = 'scoped memory for tpu_custom_call.1']
    #allocation5 [shape = 'u8[24576]{0}', space=vmem, size = 0x6000, scoped, tag = 'input window, operand 1, single buffered']
    #allocation6 [shape = 's32[1]{0}', space=sflag, size = 0x4, scoped, tag = 'scoped memory for tpu_custom_call.1']
    #allocation7 [shape = 'u8[98304]{0}', space=vmem, size = 0x18000, scoped, tag = 'input window, operand 3, single buffered']
    #allocation8 [shape = 'u8[32768]{0}', space=vmem, size = 0x8000, scoped, tag = 'input window, operand 5, single buffered']
    #allocation9 [shape = 's32[1]{0}', space=sflag, size = 0x4, scoped, tag = 'scoped memory for tpu_custom_call.1']
    #allocation10 [shape = 'u8[4096]{0}', space=vmem, size = 0x1000, scoped, tag = 'output window, operand 0, single buffered']
    %12 = vsyncpa [#allocation3], 0
    %13 = vsyncpa [#allocation6], 0
    %14 = vsyncpa [#allocation9], 0
    %15 = vsyncpa [#allocation4], 0
    // Predicated region
    $region2: #{tpu_custom_call.1} parent=1 // pred_check
      _
    $region3: #{tpu_custom_call.1} parent=1 // pred_check_branch
      %17 = sbr.rel (0) target = $region5
    $region4: #{tpu_custom_call.1} parent=1 // pred_region
      %s19 = ssub.s32 256, 256
      %20 = vsyncadd [#allocation3], %s19
      %s21 = sshll.u32 [#allocation2], 4
      %s22 = int_to_ptr.vmem [resolvable:$true] %s21
      %27 = dma.hbm_to_vmem [thread:$0]  %s0, 256, %s22, [#allocation3], 128, 128, 8
    $region5: #{tpu_custom_call.1} parent=1 // pred_fallthru
      _
    // Predicated region
    $region6: #{tpu_custom_call.1} parent=1 // pred_check
      _
    $region7: #{tpu_custom_call.1} parent=1 // pred_check_branch
      %29 = sbr.rel (0) target = $region9
    $region8: #{tpu_custom_call.1} parent=1 // pred_region
      %s31 = ssub.s32 768, 768
      %32 = vsyncadd [#allocation6], %s31
      %s33 = sshll.u32 [#allocation5], 4
      %s34 = int_to_ptr.vmem [resolvable:$true] %s33
      %39 = dma.hbm_to_vmem [thread:$0]  %s1, 768, %s34, [#allocation6], 192, 192, 12
    $region9: #{tpu_custom_call.1} parent=1 // pred_fallthru
      _
    // Predicated region
    $region10: #{tpu_custom_call.1} parent=1 // pred_check
      _
    $region11: #{tpu_custom_call.1} parent=1 // pred_check_branch
      %41 = sbr.rel (0) target = $region13
    $region12: #{tpu_custom_call.1} parent=1 // pred_region
      _
    $region13: #{tpu_custom_call.1} parent=1 // pred_fallthru
      _
    // Predicated region
    $region14: #{tpu_custom_call.1} parent=1 // pred_check
      _
    $region15: #{tpu_custom_call.1} parent=1 // pred_check_branch
      %43 = sbr.rel (0) target = $region17
    $region16: #{tpu_custom_call.1} parent=1 // pred_region
      %s45 = ssub.s32 3072, 3072
      %46 = vsyncadd [#allocation6], %s45
      %s47 = sshll.u32 [#allocation7], 4
      %s48 = int_to_ptr.vmem [resolvable:$true] %s47
      %53 = dma.hbm_to_vmem [thread:$0]  %s3, 3072, %s48, [#allocation6], 192, 192, 12
    $region17: #{tpu_custom_call.1} parent=1 // pred_fallthru
      _
    // Predicated region
    $region18: #{tpu_custom_call.1} parent=1 // pred_check
      _
    $region19: #{tpu_custom_call.1} parent=1 // pred_check_branch
      %55 = sbr.rel (0) target = $region21
    $region20: #{tpu_custom_call.1} parent=1 // pred_region
      _
    $region21: #{tpu_custom_call.1} parent=1 // pred_fallthru
      _
    // Predicated region
    $region22: #{tpu_custom_call.1} parent=1 // pred_check
      _
    $region23: #{tpu_custom_call.1} parent=1 // pred_check_branch
      %57 = sbr.rel (0) target = $region25
    $region24: #{tpu_custom_call.1} parent=1 // pred_region
      %s59 = ssub.s32 1024, 1024
      %60 = vsyncadd [#allocation9], %s59
      %s61 = sshll.u32 [#allocation8], 4
      %s62 = int_to_ptr.vmem [resolvable:$true] %s61
      %67 = dma.hbm_to_vmem [thread:$0]  %s5, 1024, %s62, [#allocation9], 64, 64, 4
    $region25: #{tpu_custom_call.1} parent=1 // pred_fallthru
      _
    // Predicated region
    $region26: #{tpu_custom_call.1} parent=1 // pred_check
      _
    $region27: #{tpu_custom_call.1} parent=1 // pred_check_branch
      %69 = sbr.rel (0) target = $region29
    $region28: #{tpu_custom_call.1} parent=1 // pred_region
      _
    $region29: #{tpu_custom_call.1} parent=1 // pred_fallthru
      _
    // Predicated region
    $region30: #{tpu_custom_call.1} parent=1 // pred_check
      _
    $region31: #{tpu_custom_call.1} parent=1 // pred_check_branch
      %71 = sbr.rel (0) target = $region33
    $region32: #{tpu_custom_call.1} parent=1 // pred_region
      %72 = dma.done [#allocation3], 256
    $region33: #{tpu_custom_call.1} parent=1 // pred_fallthru
      _
    // Predicated region
    $region34: #{tpu_custom_call.1} parent=1 // pred_check
      _
    $region35: #{tpu_custom_call.1} parent=1 // pred_check_branch
      %74 = sbr.rel (0) target = $region37
    $region36: #{tpu_custom_call.1} parent=1 // pred_region
      %75 = dma.done [#allocation6], 768
    $region37: #{tpu_custom_call.1} parent=1 // pred_fallthru
      _
    // Predicated region
    $region38: #{tpu_custom_call.1} parent=1 // pred_check
      _
    $region39: #{tpu_custom_call.1} parent=1 // pred_check_branch
      %77 = sbr.rel (0) target = $region41
    $region40: #{tpu_custom_call.1} parent=1 // pred_region
      %78 = dma.done [#allocation6], 3072
    $region41: #{tpu_custom_call.1} parent=1 // pred_fallthru
      _
    // Predicated region
    $region42: #{tpu_custom_call.1} parent=1 // pred_check
      _
    $region43: #{tpu_custom_call.1} parent=1 // pred_check_branch
      %80 = sbr.rel (0) target = $region45
    $region44: #{tpu_custom_call.1} parent=1 // pred_region
      %81 = dma.done [#allocation9], 1024
    $region45: #{tpu_custom_call.1} parent=1 // pred_fallthru
      _
    %v83 = vld [vmem:[#allocation2] sm:$0xff]
    %v84 = vld [vmem:[#allocation2 + $0x8] sm:$0xff]
    %v85 = vpack.c.bf16 %v84, %v83
    %v86 = vld [vmem:[#allocation5] sm:$0xff]
    %v87 = vld [vmem:[#allocation5 + $0x8] sm:$0xf]
    %v88 = vld [vmem:[#allocation5 + $0xc] sm:$0xff]
    %v89 = vld [vmem:[#allocation5 + $0x14] sm:$0xf]
    %v90 = vld [vmem:[#allocation5 + $0x18] sm:$0xff]
    %v91 = vld [vmem:[#allocation5 + $0x20] sm:$0xf]
    %v92 = vld [vmem:[#allocation5 + $0x24] sm:$0xff]
    %v93 = vld [vmem:[#allocation5 + $0x2c] sm:$0xf]
    %v94 = vld [vmem:[%s2] sm:$0x7]
    %v96 = vlaneseq
    %v97 = vshrl.u32 %v96, 7
    %v98 = vsub.s32 0, %v97
    %v99 = vrot.slane %v94, %v98
    %v100 = vlaneseq
    %v101 = vshrl.u32 %v100, 7
    %v102 = vsub.s32 1, %v101
    %v103 = vrot.slane %v94, %v102
    %v104 = vlaneseq
    %v105 = vshrl.u32 %v104, 7
    %v106 = vsub.s32 2, %v105
    %v107 = vrot.slane %v94, %v106
    %v119 = vunpack.c.l.b16 %v86
    %v120 = vunpack.c.h.b16 %v86
    %v121 = vunpack.c.l.b16 %v87
    %v122 = vunpack.c.l.b16 %v88
    %v123 = vunpack.c.h.b16 %v88
    %v124 = vunpack.c.l.b16 %v89
    %v125 = vunpack.c.l.b16 %v90
    %v126 = vunpack.c.h.b16 %v90
    %v127 = vunpack.c.l.b16 %v91
    %v128 = vunpack.c.l.b16 %v92
    %v129 = vunpack.c.h.b16 %v92
    %v130 = vunpack.c.l.b16 %v93
    %v131 = vpack.c.b16 %v122, %v119
    %v132 = vpack.c.b16 %v123, %v120
    %v133 = vpack.c.b16 %v124, %v121
    %v134 = vpack.c.b16 %v128, %v125
    %v135 = vpack.c.b16 %v129, %v126
    %v136 = vpack.c.b16 %v130, %v127
    %vm140 = vcmask 252928
    %v142 = vsel %vm140, %v85, 0
    %vm144 = vcmask 1046528
    %vm145 = vcmask 1047552
    %v146 = vsel %vm144, 4294967295, 65535
    %v147 = vsel %vm145, %v146, 0
    %v149 = vand.u32 %v134, %v147
    %v152 = vand.u32 %v135, %v147
    %v155 = vand.u32 %v136, %v147
    %157 = vmatprep.subr.bf16.mxu0 %v132
    %158 = vmatpush1.bf16.msra.mxu0 %v131
    %159 = vmatprep.subr.bf16.mxu0 %v152
    %160 = vmatpush1.bf16.msra.mxu0 %v149
    %161 = vmatprep.subr.bf16.mxu0 0
    %162 = vmatpush1.bf16.msra.mxu0 0
    %163 = vmatprep.subr.bf16.mxu0 0
    %164 = vmatpush1.bf16.msra.mxu0 0
    %165 = vmatprep.subr.bf16.mxu0 0
    %166 = vmatpush1.bf16.msra.mxu0 0
    %167 = vmatprep.subr.bf16.mxu0 0
    %168 = vmatpush1.bf16.msra.mxu0 0
    %169 = vmatprep.subr.bf16.mxu0 0
    %170 = vmatpush1.bf16.msra.mxu0 0
    %171 = vmatprep.subr.bf16.mxu0 0
    %172 = vmatpush1.bf16.msra.mxu0 0
    %173 = vmatprep.subr.bf16.mxu0 0
    %174 = vmatpush1.bf16.msra.mxu0 0
    %175 = vmatprep.subr.bf16.mxu0 0
    %176 = vmatpush1.bf16.msra.mxu0 0
    %177 = vmatprep.subr.bf16.mxu0 0
    %178 = vmatpush1.bf16.msra.mxu0 0
    %179 = vmatprep.subr.bf16.mxu0 0
    %180 = vmatpush1.bf16.msra.mxu0 0
    %181 = vmatprep.subr.bf16.mxu0 0
    %182 = vmatpush1.bf16.msra.mxu0 0
    %183 = vmatprep.subr.bf16.mxu0 0
    %184 = vmatpush1.bf16.msra.mxu0 0
    %185 = vmatprep.subr.bf16.mxu0 0
    %186 = vmatpush1.bf16.msra.mxu0 0
    %187 = vmatprep.subr.bf16.mxu0 0
    %188 = vmatpush1.bf16.msra.mxu0 0
    %189 = vmatprep.mubr.bf16.mxu0 0
    %190 = vmatmul.mubr.bf16.gmra.mrb[0].mxu0 %v142
    %v191 = vpop.f32.mrb[0].mxu0
    %v192 = vadd.f32 %v99, %v191
    %v193 = vpop.f32.mrb[0].mxu0
    %v194 = vadd.f32 %v103, %v193
    %v195 = vpop.f32.mrb[0].mxu0
    %v196 = vadd.f32 %v99, %v195
    %v197 = vpop.f32.mrb[0].mxu0
    %v198 = vadd.f32 %v103, %v197
    %199 = vdwg.mxu0
    %200 = vmatprep.subr.bf16.mxu0 0
    %201 = vmatpush1.bf16.msra.mxu0 %v133
    %202 = vmatprep.subr.bf16.mxu0 0
    %203 = vmatpush1.bf16.msra.mxu0 %v155
    %204 = vmatprep.subr.bf16.mxu0 0
    %205 = vmatpush1.bf16.msra.mxu0 0
    %206 = vmatprep.subr.bf16.mxu0 0
    %207 = vmatpush1.bf16.msra.mxu0 0
    %208 = vmatprep.subr.bf16.mxu0 0
    %209 = vmatpush1.bf16.msra.mxu0 0
    %210 = vmatprep.subr.bf16.mxu0 0
    %211 = vmatpush1.bf16.msra.mxu0 0
    %212 = vmatprep.subr.bf16.mxu0 0
    %213 = vmatpush1.bf16.msra.mxu0 0
    %214 = vmatprep.subr.bf16.mxu0 0
    %215 = vmatpush1.bf16.msra.mxu0 0
    %216 = vmatprep.subr.bf16.mxu0 0
    %217 = vmatpush1.bf16.msra.mxu0 0
    %218 = vmatprep.subr.bf16.mxu0 0
    %219 = vmatpush1.bf16.msra.mxu0 0
    %220 = vmatprep.subr.bf16.mxu0 0
    %221 = vmatpush1.bf16.msra.mxu0 0
    %222 = vmatprep.subr.bf16.mxu0 0
    %223 = vmatpush1.bf16.msra.mxu0 0
    %224 = vmatprep.subr.bf16.mxu0 0
    %225 = vmatpush1.bf16.msra.mxu0 0
    %226 = vmatprep.subr.bf16.mxu0 0
    %227 = vmatpush1.bf16.msra.mxu0 0
    %228 = vmatprep.subr.bf16.mxu0 0
    %229 = vmatpush1.bf16.msra.mxu0 0
    %230 = vmatprep.subr.bf16.mxu0 0
    %231 = vmatpush1.bf16.msra.mxu0 0
    %232 = vmatprep.mubr.bf16.mxu0 0
    %233 = vmatmul.mubr.bf16.gmra.mrb[0].mxu0 %v142
    %v234 = vpop.f32.mrb[0].mxu0
    %v235 = vadd.f32 %v107, %v234
    %v236 = vpop.f32.mrb[0].mxu0
    %v237 = vpop.f32.mrb[0].mxu0
    %v238 = vadd.f32 %v107, %v237
    %v239 = vpop.f32.mrb[0].mxu0
    %240 = vdwg.mxu0
    %v241 = vmul.f32 %v192, 0.5
    %v242 = vmul.f32 %v196, 0.5
    %v243 = vtanh.pop %v241
    %v244 = vtanh.pop %v242
    %v245 = vmul.f32 %v243, 0.5
    %v246 = vmul.f32 %v244, 0.5
    %v247 = vadd.f32 %v245, 0.5
    %v248 = vadd.f32 %v246, 0.5
    %v249 = vtanh.pop %v194
    %v250 = vtanh.pop %v198
    %v251 = vmul.f32 %v235, 0.5
    %v252 = vmul.f32 %v238, 0.5
    %v253 = vtanh.pop %v251
    %v254 = vtanh.pop %v252
    %v255 = vmul.f32 %v253, 0.5
    %v256 = vmul.f32 %v254, 0.5
    %v257 = vadd.f32 %v255, 0.5
    %v258 = vadd.f32 %v256, 0.5
    %v259 = vmul.f32 %v247, %v249
    %v260 = vmul.f32 %v248, %v250
    %v261 = vtanh.pop %v259
    %v262 = vtanh.pop %v260
    %v263 = vmul.f32 %v257, %v261
    %v264 = vmul.f32 %v258, %v262
    %v265 = vpack.c.bf16 %v264, %v263
    %v266 = vld [vmem:[#allocation7] sm:$0xff]
    %v267 = vld [vmem:[#allocation7 + $0x8] sm:$0xf]
    %v268 = vld [vmem:[#allocation7 + $0xc] sm:$0xff]
    %v269 = vld [vmem:[#allocation7 + $0x14] sm:$0xf]
    %v270 = vld [vmem:[#allocation7 + $0x18] sm:$0xff]
    %v271 = vld [vmem:[#allocation7 + $0x20] sm:$0xf]
    %v272 = vld [vmem:[#allocation7 + $0x24] sm:$0xff]
    %v273 = vld [vmem:[#allocation7 + $0x2c] sm:$0xf]
    %v274 = vld [vmem:[#allocation7 + $0x30] sm:$0xff]
    %v275 = vld [vmem:[#allocation7 + $0x38] sm:$0xf]
    %v276 = vld [vmem:[#allocation7 + $0x3c] sm:$0xff]
    %v277 = vld [vmem:[#allocation7 + $0x44] sm:$0xf]
    %v278 = vld [vmem:[#allocation7 + $0x48] sm:$0xff]
    %v279 = vld [vmem:[#allocation7 + $0x50] sm:$0xf]
    %v280 = vld [vmem:[#allocation7 + $0x54] sm:$0xff]
    %v281 = vld [vmem:[#allocation7 + $0x5c] sm:$0xf]
    %v282 = vld [vmem:[#allocation7 + $0x60] sm:$0xff]
    %v283 = vld [vmem:[#allocation7 + $0x68] sm:$0xf]
    %v284 = vld [vmem:[#allocation7 + $0x6c] sm:$0xff]
    %v285 = vld [vmem:[#allocation7 + $0x74] sm:$0xf]
    %v286 = vld [vmem:[#allocation7 + $0x78] sm:$0xff]
    %v287 = vld [vmem:[#allocation7 + $0x80] sm:$0xf]
    %v288 = vld [vmem:[#allocation7 + $0x84] sm:$0xff]
    %v289 = vld [vmem:[#allocation7 + $0x8c] sm:$0xf]
    %v290 = vld [vmem:[#allocation7 + $0x90] sm:$0xff]
    %v291 = vld [vmem:[#allocation7 + $0x98] sm:$0xf]
    %v292 = vld [vmem:[#allocation7 + $0x9c] sm:$0xff]
    %v293 = vld [vmem:[#allocation7 + $0xa4] sm:$0xf]
    %v294 = vld [vmem:[#allocation7 + $0xa8] sm:$0xff]
    %v295 = vld [vmem:[#allocation7 + $0xb0] sm:$0xf]
    %v296 = vld [vmem:[#allocation7 + $0xb4] sm:$0xff]
    %v297 = vld [vmem:[#allocation7 + $0xbc] sm:$0xf]
    %v298 = vld [vmem:[%s4] sm:$0x7]
    %v300 = vlaneseq
    %v301 = vshrl.u32 %v300, 7
    %v302 = vsub.s32 0, %v301
    %v303 = vrot.slane %v298, %v302
    %v304 = vlaneseq
    %v305 = vshrl.u32 %v304, 7
    %v306 = vsub.s32 1, %v305
    %v307 = vrot.slane %v298, %v306
    %v308 = vlaneseq
    %v309 = vshrl.u32 %v308, 7
    %v310 = vsub.s32 2, %v309
    %v311 = vrot.slane %v298, %v310
    %v347 = vunpack.c.l.b16 %v266
    %v348 = vunpack.c.h.b16 %v266
    %v349 = vunpack.c.l.b16 %v267
    %v350 = vunpack.c.l.b16 %v268
    %v351 = vunpack.c.h.b16 %v268
    %v352 = vunpack.c.l.b16 %v269
    %v353 = vunpack.c.l.b16 %v270
    %v354 = vunpack.c.h.b16 %v270
    %v355 = vunpack.c.l.b16 %v271
    %v356 = vunpack.c.l.b16 %v272
    %v357 = vunpack.c.h.b16 %v272
    %v358 = vunpack.c.l.b16 %v273
    %v359 = vunpack.c.l.b16 %v274
    %v360 = vunpack.c.h.b16 %v274
    %v361 = vunpack.c.l.b16 %v275
    %v362 = vunpack.c.l.b16 %v276
    %v363 = vunpack.c.h.b16 %v276
    %v364 = vunpack.c.l.b16 %v277
    %v365 = vunpack.c.l.b16 %v278
    %v366 = vunpack.c.h.b16 %v278
    %v367 = vunpack.c.l.b16 %v279
    %v368 = vunpack.c.l.b16 %v280
    %v369 = vunpack.c.h.b16 %v280
    %v370 = vunpack.c.l.b16 %v281
    %v371 = vunpack.c.l.b16 %v282
    %v372 = vunpack.c.h.b16 %v282
    %v373 = vunpack.c.l.b16 %v283
    %v374 = vunpack.c.l.b16 %v284
    %v375 = vunpack.c.h.b16 %v284
    %v376 = vunpack.c.l.b16 %v285
    %v377 = vunpack.c.l.b16 %v286
    %v378 = vunpack.c.h.b16 %v286
    %v379 = vunpack.c.l.b16 %v287
    %v380 = vunpack.c.l.b16 %v288
    %v381 = vunpack.c.h.b16 %v288
    %v382 = vunpack.c.l.b16 %v289
    %v383 = vunpack.c.l.b16 %v290
    %v384 = vunpack.c.h.b16 %v290
    %v385 = vunpack.c.l.b16 %v291
    %v386 = vunpack.c.l.b16 %v292
    %v387 = vunpack.c.h.b16 %v292
    %v388 = vunpack.c.l.b16 %v293
    %v389 = vunpack.c.l.b16 %v294
    %v390 = vunpack.c.h.b16 %v294
    %v391 = vunpack.c.l.b16 %v295
    %v392 = vunpack.c.l.b16 %v296
    %v393 = vunpack.c.h.b16 %v296
    %v394 = vunpack.c.l.b16 %v297
    %v395 = vpack.c.b16 %v350, %v347
    %v396 = vpack.c.b16 %v351, %v348
    %v397 = vpack.c.b16 %v352, %v349
    %v398 = vpack.c.b16 %v356, %v353
    %v399 = vpack.c.b16 %v357, %v354
    %v400 = vpack.c.b16 %v358, %v355
    %v401 = vpack.c.b16 %v362, %v359
    %v402 = vpack.c.b16 %v363, %v360
    %v403 = vpack.c.b16 %v364, %v361
    %v404 = vpack.c.b16 %v368, %v365
    %v405 = vpack.c.b16 %v369, %v366
    %v406 = vpack.c.b16 %v370, %v367
    %v407 = vpack.c.b16 %v374, %v371
    %v408 = vpack.c.b16 %v375, %v372
    %v409 = vpack.c.b16 %v376, %v373
    %v410 = vpack.c.b16 %v380, %v377
    %v411 = vpack.c.b16 %v381, %v378
    %v412 = vpack.c.b16 %v382, %v379
    %v413 = vpack.c.b16 %v386, %v383
    %v414 = vpack.c.b16 %v387, %v384
    %v415 = vpack.c.b16 %v388, %v385
    %v416 = vpack.c.b16 %v392, %v389
    %v417 = vpack.c.b16 %v393, %v390
    %v418 = vpack.c.b16 %v394, %v391
    %443 = vmatprep.subr.bf16.mxu0 %v396
    %444 = vmatpush1.bf16.msra.mxu0 %v395
    %445 = vmatprep.subr.bf16.mxu0 %v399
    %446 = vmatpush1.bf16.msra.mxu0 %v398
    %447 = vmatprep.subr.bf16.mxu0 %v402
    %448 = vmatpush1.bf16.msra.mxu0 %v401
    %449 = vmatprep.subr.bf16.mxu0 %v405
    %450 = vmatpush1.bf16.msra.mxu0 %v404
    %451 = vmatprep.subr.bf16.mxu0 %v408
    %452 = vmatpush1.bf16.msra.mxu0 %v407
    %453 = vmatprep.subr.bf16.mxu0 %v411
    %454 = vmatpush1.bf16.msra.mxu0 %v410
    %455 = vmatprep.subr.bf16.mxu0 %v414
    %456 = vmatpush1.bf16.msra.mxu0 %v413
    %457 = vmatprep.subr.bf16.mxu0 %v417
    %458 = vmatpush1.bf16.msra.mxu0 %v416
    %459 = vmatprep.subr.bf16.mxu0 0
    %460 = vmatpush1.bf16.msra.mxu0 0
    %461 = vmatprep.subr.bf16.mxu0 0
    %462 = vmatpush1.bf16.msra.mxu0 0
    %463 = vmatprep.subr.bf16.mxu0 0
    %464 = vmatpush1.bf16.msra.mxu0 0
    %465 = vmatprep.subr.bf16.mxu0 0
    %466 = vmatpush1.bf16.msra.mxu0 0
    %467 = vmatprep.subr.bf16.mxu0 0
    %468 = vmatpush1.bf16.msra.mxu0 0
    %469 = vmatprep.subr.bf16.mxu0 0
    %470 = vmatpush1.bf16.msra.mxu0 0
    %471 = vmatprep.subr.bf16.mxu0 0
    %472 = vmatpush1.bf16.msra.mxu0 0
    %473 = vmatprep.subr.bf16.mxu0 0
    %474 = vmatpush1.bf16.msra.mxu0 0
    %475 = vmatprep.mubr.bf16.mxu0 0
    %476 = vmatmul.mubr.bf16.gmra.mrb[0].mxu0 %v265
    %v477 = vpop.f32.mrb[0].mxu0
    %v478 = vadd.f32 %v303, %v477
    %v479 = vpop.f32.mrb[0].mxu0
    %v480 = vadd.f32 %v307, %v479
    %v481 = vpop.f32.mrb[0].mxu0
    %v482 = vadd.f32 %v303, %v481
    %v483 = vpop.f32.mrb[0].mxu0
    %v484 = vadd.f32 %v307, %v483
    %485 = vdwg.mxu0
    %486 = vmatprep.subr.bf16.mxu0 0
    %487 = vmatpush1.bf16.msra.mxu0 %v397
    %488 = vmatprep.subr.bf16.mxu0 0
    %489 = vmatpush1.bf16.msra.mxu0 %v400
    %490 = vmatprep.subr.bf16.mxu0 0
    %491 = vmatpush1.bf16.msra.mxu0 %v403
    %492 = vmatprep.subr.bf16.mxu0 0
    %493 = vmatpush1.bf16.msra.mxu0 %v406
    %494 = vmatprep.subr.bf16.mxu0 0
    %495 = vmatpush1.bf16.msra.mxu0 %v409
    %496 = vmatprep.subr.bf16.mxu0 0
    %497 = vmatpush1.bf16.msra.mxu0 %v412
    %498 = vmatprep.subr.bf16.mxu0 0
    %499 = vmatpush1.bf16.msra.mxu0 %v415
    %500 = vmatprep.subr.bf16.mxu0 0
    %501 = vmatpush1.bf16.msra.mxu0 %v418
    %502 = vmatprep.subr.bf16.mxu0 0
    %503 = vmatpush1.bf16.msra.mxu0 0
    %504 = vmatprep.subr.bf16.mxu0 0
    %505 = vmatpush1.bf16.msra.mxu0 0
    %506 = vmatprep.subr.bf16.mxu0 0
    %507 = vmatpush1.bf16.msra.mxu0 0
    %508 = vmatprep.subr.bf16.mxu0 0
    %509 = vmatpush1.bf16.msra.mxu0 0
    %510 = vmatprep.subr.bf16.mxu0 0
    %511 = vmatpush1.bf16.msra.mxu0 0
    %512 = vmatprep.subr.bf16.mxu0 0
    %513 = vmatpush1.bf16.msra.mxu0 0
    %514 = vmatprep.subr.bf16.mxu0 0
    %515 = vmatpush1.bf16.msra.mxu0 0
    %516 = vmatprep.subr.bf16.mxu0 0
    %517 = vmatpush1.bf16.msra.mxu0 0
    %518 = vmatprep.mubr.bf16.mxu0 0
    %519 = vmatmul.mubr.bf16.gmra.mrb[0].mxu0 %v265
    %v520 = vpop.f32.mrb[0].mxu0
    %v521 = vadd.f32 %v311, %v520
    %v522 = vpop.f32.mrb[0].mxu0
    %v523 = vpop.f32.mrb[0].mxu0
    %v524 = vadd.f32 %v311, %v523
    %v525 = vpop.f32.mrb[0].mxu0
    %526 = vdwg.mxu0
    %v527 = vmul.f32 %v478, 0.5
    %v528 = vmul.f32 %v482, 0.5
    %v529 = vtanh.pop %v527
    %v530 = vtanh.pop %v528
    %v531 = vmul.f32 %v529, 0.5
    %v532 = vmul.f32 %v530, 0.5
    %v533 = vadd.f32 %v531, 0.5
    %v534 = vadd.f32 %v532, 0.5
    %v535 = vtanh.pop %v480
    %v536 = vtanh.pop %v484
    %v537 = vmul.f32 %v521, 0.5
    %v538 = vmul.f32 %v524, 0.5
    %v539 = vtanh.pop %v537
    %v540 = vtanh.pop %v538
    %v541 = vmul.f32 %v539, 0.5
    %v542 = vmul.f32 %v540, 0.5
    %v543 = vadd.f32 %v541, 0.5
    %v544 = vadd.f32 %v542, 0.5
    %v545 = vmul.f32 %v533, %v535
    %v546 = vmul.f32 %v534, %v536
    %v547 = vtanh.pop %v545
    %v548 = vtanh.pop %v546
    %v549 = vmul.f32 %v543, %v547
    %v550 = vmul.f32 %v544, %v548
    %v551 = vpack.c.bf16 %v550, %v549
    %v552 = vld [vmem:[#allocation8] sm:$0xf]
    %v553 = vld [vmem:[#allocation8 + $0x4] sm:$0xf]
    %v554 = vld [vmem:[#allocation8 + $0x8] sm:$0xf]
    %v555 = vld [vmem:[#allocation8 + $0xc] sm:$0xf]
    %v556 = vld [vmem:[#allocation8 + $0x10] sm:$0xf]
    %v557 = vld [vmem:[#allocation8 + $0x14] sm:$0xf]
    %v558 = vld [vmem:[#allocation8 + $0x18] sm:$0xf]
    %v559 = vld [vmem:[#allocation8 + $0x1c] sm:$0xf]
    %v560 = vld [vmem:[#allocation8 + $0x20] sm:$0xf]
    %v561 = vld [vmem:[#allocation8 + $0x24] sm:$0xf]
    %v562 = vld [vmem:[#allocation8 + $0x28] sm:$0xf]
    %v563 = vld [vmem:[#allocation8 + $0x2c] sm:$0xf]
    %v564 = vld [vmem:[#allocation8 + $0x30] sm:$0xf]
    %v565 = vld [vmem:[#allocation8 + $0x34] sm:$0xf]
    %v566 = vld [vmem:[#allocation8 + $0x38] sm:$0xf]
    %v567 = vld [vmem:[#allocation8 + $0x3c] sm:$0xf]
    %v568 = vld [vmem:[%s6] sm:$0x1]
    %v570 = vlaneseq
    %v571 = vshrl.u32 %v570, 7
    %v572 = vsub.s32 0, %v571
    %v573 = vrot.slane %v568, %v572
    %v591 = vunpack.c.l.b16 %v552
    %v592 = vunpack.c.l.b16 %v553
    %v593 = vunpack.c.l.b16 %v554
    %v594 = vunpack.c.l.b16 %v555
    %v595 = vunpack.c.l.b16 %v556
    %v596 = vunpack.c.l.b16 %v557
    %v597 = vunpack.c.l.b16 %v558
    %v598 = vunpack.c.l.b16 %v559
    %v599 = vunpack.c.l.b16 %v560
    %v600 = vunpack.c.l.b16 %v561
    %v601 = vunpack.c.l.b16 %v562
    %v602 = vunpack.c.l.b16 %v563
    %v603 = vunpack.c.l.b16 %v564
    %v604 = vunpack.c.l.b16 %v565
    %v605 = vunpack.c.l.b16 %v566
    %v606 = vunpack.c.l.b16 %v567
    %v607 = vpack.c.b16 %v592, %v591
    %v608 = vpack.c.b16 %v594, %v593
    %v609 = vpack.c.b16 %v596, %v595
    %v610 = vpack.c.b16 %v598, %v597
    %v611 = vpack.c.b16 %v600, %v599
    %v612 = vpack.c.b16 %v602, %v601
    %v613 = vpack.c.b16 %v604, %v603
    %v614 = vpack.c.b16 %v606, %v605
    %623 = vmatprep.subr.bf16.mxu0 0
    %624 = vmatpush1.bf16.msra.mxu0 %v607
    %625 = vmatprep.subr.bf16.mxu0 0
    %626 = vmatpush1.bf16.msra.mxu0 %v608
    %627 = vmatprep.subr.bf16.mxu0 0
    %628 = vmatpush1.bf16.msra.mxu0 %v609
    %629 = vmatprep.subr.bf16.mxu0 0
    %630 = vmatpush1.bf16.msra.mxu0 %v610
    %631 = vmatprep.subr.bf16.mxu0 0
    %632 = vmatpush1.bf16.msra.mxu0 %v611
    %633 = vmatprep.subr.bf16.mxu0 0
    %634 = vmatpush1.bf16.msra.mxu0 %v612
    %635 = vmatprep.subr.bf16.mxu0 0
    %636 = vmatpush1.bf16.msra.mxu0 %v613
    %637 = vmatprep.subr.bf16.mxu0 0
    %638 = vmatpush1.bf16.msra.mxu0 %v614
    %639 = vmatprep.subr.bf16.mxu0 0
    %640 = vmatpush1.bf16.msra.mxu0 0
    %641 = vmatprep.subr.bf16.mxu0 0
    %642 = vmatpush1.bf16.msra.mxu0 0
    %643 = vmatprep.subr.bf16.mxu0 0
    %644 = vmatpush1.bf16.msra.mxu0 0
    %645 = vmatprep.subr.bf16.mxu0 0
    %646 = vmatpush1.bf16.msra.mxu0 0
    %647 = vmatprep.subr.bf16.mxu0 0
    %648 = vmatpush1.bf16.msra.mxu0 0
    %649 = vmatprep.subr.bf16.mxu0 0
    %650 = vmatpush1.bf16.msra.mxu0 0
    %651 = vmatprep.subr.bf16.mxu0 0
    %652 = vmatpush1.bf16.msra.mxu0 0
    %653 = vmatprep.subr.bf16.mxu0 0
    %654 = vmatpush1.bf16.msra.mxu0 0
    %655 = vmatprep.mubr.bf16.mxu0 0
    %656 = vmatmul.mubr.bf16.gmra.mrb[0].mxu0 %v551
    %v657 = vpop.f32.mrb[0].mxu0
    %v658 = vadd.f32 %v573, %v657
    %v659 = vpop.f32.mrb[0].mxu0
    %v660 = vpop.f32.mrb[0].mxu0
    %v661 = vadd.f32 %v573, %v660
    %v662 = vpop.f32.mrb[0].mxu0
    %663 = vdwg.mxu0
    %v664 = vpack.c.bf16 %v661, %v658
    %v666 = vunpack.c.l.b16 %v664
    %v667 = vunpack.c.h.b16 %v664
    %v668 = vpack.c.b16 %v666, %v666
    %v669 = vpack.c.b16 %v667, %v667
    %672 = vst [vmem:[#allocation10] sm:$0xf] %v668
    %673 = vst [vmem:[#allocation10 + $0x4] sm:$0xf] %v669
    // Predicated region
    $region46: #{tpu_custom_call.1} parent=1 // pred_check
      _
    $region47: #{tpu_custom_call.1} parent=1 // pred_check_branch
      %675 = sbr.rel (0) target = $region49
    $region48: #{tpu_custom_call.1} parent=1 // pred_region
      %s677 = ssub.s32 128, 128
      %678 = vsyncadd [#allocation4], %s677
      %s679 = sshll.u32 [#allocation10], 4
      %s680 = int_to_ptr.vmem [resolvable:$true] %s679
      %685 = dma.vmem_to_hbm [thread:$0]  %s680, 128, %s7, [#allocation4], 64, 64, 4
    $region49: #{tpu_custom_call.1} parent=1 // pred_fallthru
      _
    // Predicated region
    $region50: #{tpu_custom_call.1} parent=1 // pred_check
      _
    $region51: #{tpu_custom_call.1} parent=1 // pred_check_branch
      %687 = sbr.rel (0) target = $region53
    $region52: #{tpu_custom_call.1} parent=1 // pred_region
      %688 = dma.done [#allocation4], 128
    $region53: #{tpu_custom_call.1} parent=1 // pred_fallthru
      _
    %689 = vsyncpa [#allocation3], 1
    %690 = vsyncpa [#allocation6], 1
    %691 = vsyncpa [#allocation9], 1
    %692 = vsyncpa [#allocation4], 1

</llo_original>
